<compile_context>
chip_gen: v5e
topology: v5e:2x2
jax: 0.10.0
libtpu: 0.0.40
codegen_flags: <defaults>
</compile_context>

<pallas_src>
import functools

import jax
import jax.numpy as jnp
from jax import lax
from jax.experimental import pallas as pl
from jax.experimental.pallas import tpu as pltpu

IGNORE_INDEX = 255
LANES = 128
SUBLANES = 8
CHUNK_ROWS = 512           # rows per in-kernel reduction chunk (256 KiB f32)
MAX_BLOCK_ROWS = 8192      # 8192 x 128 x 4 B = 4 MiB per f32 input block
_MIB = 1024 * 1024


def _sublane_granularity(dtype) -> int:
    """Minimum second-to-last block dim for this dtype's VMEM tiling."""
    nbytes = jnp.dtype(dtype).itemsize
    if nbytes >= 4:
        return 8
    if nbytes == 2:
        return 16
    return 32


def _round_up(x: int, m: int) -> int:
    return ((x + m - 1) // m) * m


def _choose_block_rows(rows: int, gran: int) -> tuple[int, int]:
    """Pick (block_rows, chunk_rows) for the streaming reduction."""
    if rows < CHUNK_ROWS:
        br = _round_up(rows, gran)
        return br, br
    block_rows = min(MAX_BLOCK_ROWS, _round_up(rows, CHUNK_ROWS))
    n_blocks = pl.cdiv(rows, block_rows)
    # Keep v7x's two TensorCores busy (grid axis is "parallel"): for large
    # inputs prefer >= 4 blocks, and nudge small odd block counts upward.
    if rows >= 4 * CHUNK_ROWS and (n_blocks < 4 or (n_blocks < 8 and n_blocks % 2)):
        target = 4 if n_blocks < 4 else n_blocks + 1
        block_rows = max(CHUNK_ROWS,
                         (rows // target) // CHUNK_ROWS * CHUNK_ROWS)
    return block_rows, CHUNK_ROWS


def _iou_partial_kernel(out_ref, tgt_ref, num_ref, den_ref, *,
                        block_rows: int, chunk_rows: int,
                        total_rows: int, ignore_index: int):
    """Per-block (8,128) partial sums of num / den terms.

    out_ref/tgt_ref: (block_rows, LANES) input tiles (native dtypes).
    num_ref/den_ref: (SUBLANES, LANES) f32 per-block partial-sum outputs.
    """
    n_steps = block_rows // chunk_rows
    ragged = total_rows % block_rows != 0

    def partial_sums(r0, mask_tail):
        o = out_ref[pl.ds(r0, chunk_rows), :].astype(jnp.float32)
        t_raw = tgt_ref[pl.ds(r0, chunk_rows), :]
        keep = t_raw != ignore_index           # compare in native dtype
        if mask_tail:
            base = pl.program_id(0) * block_rows + r0
            row_ids = base + lax.broadcasted_iota(
                jnp.int32, (chunk_rows, LANES), 0)
            keep = jnp.logical_and(keep, row_ids < total_rows)
        t = t_raw.astype(jnp.float32)
        ot = o * t
        # Keep the select form (not mask-multiply): the ragged tail of the last
        # block holds unspecified DMA data; NaN/Inf there must not propagate.
        num_t = jnp.where(keep, ot, 0.0)
        den_t = jnp.where(keep, o + t - ot, 0.0)
        folds = chunk_rows // SUBLANES
        # Reduce along the leading (untiled) axis only: pure VPU vreg adds.
        return (jnp.sum(num_t.reshape(folds, SUBLANES, LANES), axis=0),
                jnp.sum(den_t.reshape(folds, SUBLANES, LANES), axis=0))

    def run(mask_tail):
        if n_steps == 1:
            n_p, d_p = partial_sums(0, mask_tail)
            num_ref[...] = n_p
            den_ref[...] = d_p
            return

        def body(step, carry):
            acc_n, acc_d = carry
            r0 = pl.multiple_of(step * chunk_rows, chunk_rows)
            n_p, d_p = partial_sums(r0, mask_tail)
            return acc_n + n_p, acc_d + d_p

        zeros = jnp.zeros((SUBLANES, LANES), jnp.float32)
        acc_n, acc_d = lax.fori_loop(0, n_steps, body, (zeros, zeros))
        num_ref[...] = acc_n
        den_ref[...] = acc_d

    if not ragged:
        run(False)
    else:
        last = pl.num_programs(0) - 1

        @pl.when(pl.program_id(0) != last)
        def _():
            run(False)          # hot path: no iota/compare masking

        @pl.when(pl.program_id(0) == last)
        def _():
            run(True)           # mask rows >= total_rows in the last block


def iou_loss(outputs: jax.Array, targets: jax.Array,
             ignore_index: int = IGNORE_INDEX) -> jax.Array:
    """Computes the IoU loss (scalar f32), matching the PyTorch module."""
    o_flat = outputs.reshape(-1)
    t_flat = targets.reshape(-1)
    n = o_flat.shape[0]

    rows = n // LANES
    rem = n - rows * LANES

    num = jnp.float32(0.0)
    den = jnp.float32(0.0)

    if rows > 0:
        gran = max(_sublane_granularity(o_flat.dtype),
                   _sublane_granularity(t_flat.dtype))
        block_rows, chunk_rows = _choose_block_rows(rows, gran)
        n_blocks = pl.cdiv(rows, block_rows)

        if rem == 0:
            # Zero-copy: reshape of a contiguous array.
            o2 = o_flat.reshape(rows, LANES)
            t2 = t_flat.reshape(rows, LANES)
        else:
            # TODO(synk): prefix slice materializes a copy when n % 128 != 0;
            # typical NCHW image tensors take the zero-copy path above.
            o2 = o_flat[: rows * LANES].reshape(rows, LANES)
            t2 = t_flat[: rows * LANES].reshape(rows, LANES)

        o_item = jnp.dtype(o2.dtype).itemsize
        t_item = jnp.dtype(t2.dtype).itemsize

        kernel = functools.partial(
            _iou_partial_kernel,
            block_rows=block_rows,
            chunk_rows=chunk_rows,
            total_rows=rows,
            ignore_index=ignore_index,
        )

        part_shape = jax.ShapeDtypeStruct(
            (n_blocks * SUBLANES, LANES), jnp.float32)

        in_bytes = rows * LANES * (o_item + t_item)
        out_bytes = 2 * n_blocks * SUBLANES * LANES * 4
        # Double-buffered input blocks + chunk temporaries / compiler slack.
        # Explicit limit so 8192-row blocks pass v5e's 16 MiB default scoped
        # VMEM; stays well under v7x's 64 MiB per-TC physical VMEM.
        vmem_limit = min(
            56 * _MIB,
            max(16 * _MIB,
                2 * block_rows * LANES * (o_item + t_item)
                + out_bytes + 8 * _MIB))

        num_parts, den_parts = pl.pallas_call(
            kernel,
            out_shape=(part_shape, part_shape),
            grid_spec=pltpu.PrefetchScalarGridSpec(
                num_scalar_prefetch=0,
                grid=(n_blocks,),
                in_specs=[
                    pl.BlockSpec((block_rows, LANES), lambda i: (i, 0)),
                    pl.BlockSpec((block_rows, LANES), lambda i: (i, 0)),
                ],
                out_specs=(
                    pl.BlockSpec((SUBLANES, LANES), lambda i: (i, 0)),
                    pl.BlockSpec((SUBLANES, LANES), lambda i: (i, 0)),
                ),
            ),
            compiler_params=pltpu.CompilerParams(
                dimension_semantics=("parallel",),
                vmem_limit_bytes=int(vmem_limit),
            ),
            cost_estimate=pl.CostEstimate(
                flops=8 * rows * LANES,
                transcendentals=0,
                bytes_accessed=in_bytes + out_bytes,
            ),
        )(o2, t2)

        num = num + jnp.sum(num_parts)
        den = den + jnp.sum(den_parts)

    if rem > 0 or rows == 0:
        # Tiny (< 128-element) tail, or inputs too small for one lane-row:
        # fold in with plain JAX (negligible cost).
        o_tail = o_flat[rows * LANES:].astype(jnp.float32)
        t_tail_raw = t_flat[rows * LANES:]
        keep = t_tail_raw != ignore_index
        t_tail = t_tail_raw.astype(jnp.float32)
        ot = o_tail * t_tail
        num = num + jnp.sum(jnp.where(keep, ot, 0.0))
        den = den + jnp.sum(jnp.where(keep, o_tail + t_tail - ot, 0.0))

    # Note: den == 0 (everything ignored / all zeros) yields Inf/NaN exactly
    # like the PyTorch reference does.
    return 1.0 - num / den


def _reference_iou_loss(outputs, targets, ignore_index=IGNORE_INDEX):
    mask = (targets != ignore_index).astype(jnp.float32)
    o = outputs.astype(jnp.float32)
    t = targets.astype(jnp.float32)
    num = jnp.sum(o * t * mask)
    den = jnp.sum(o * mask + t * mask - o * t * mask)
    return 1.0 - num / den


if __name__ == "__main__":
    key = jax.random.PRNGKey(0)
    k1, k2, k3 = jax.random.split(key, 3)

    B, C, H, W = 2, 4, 16, 16
    # Predicted probabilities in [0, 1]
    outputs = jax.random.uniform(k1, (B, C, H, W), dtype=jnp.float32)
    # Binary targets with some ignored (=255) pixels, kept as integers
    targets = jax.random.bernoulli(k2, 0.5, (B, C, H, W)).astype(jnp.int32)
    ignore_mask = jax.random.bernoulli(k3, 0.1, (B, C, H, W))
    targets = jnp.where(ignore_mask, IGNORE_INDEX, targets)

    loss = jax.block_until_ready(iou_loss(outputs, targets))
    ref = jax.block_until_ready(_reference_iou_loss(outputs, targets))

    assert jnp.allclose(loss, ref, rtol=1e-5, atol=1e-5), (loss, ref)
    print("KERNEL_OK")
</pallas_src>

<mosaic_0001>
module attributes {stable_mosaic.version = 11 : i64} {
  func.func @_iou_partial_kernel(%arg0: i32, %arg1: memref<16x128xf32, #tpu.memory_space<vmem>>, %arg2: memref<16x128xi32, #tpu.memory_space<vmem>>, %arg3: memref<8x128xf32, #tpu.memory_space<vmem>>, %arg4: memref<8x128xf32, #tpu.memory_space<vmem>>) attributes {dimension_semantics = [#tpu.dimension_semantics<parallel>], iteration_bounds = array<i64: 1>, scalar_prefetch = 0 : i64, scratch_operands = 0 : i64, tpu.core_type = #tpu.core_type<tc>, window_params = [{transform_indices = @transform_0, window_bounds = array<i64: 16, 128>}, {transform_indices = @transform_1, window_bounds = array<i64: 16, 128>}, {transform_indices = @transform_2, window_bounds = array<i64: 8, 128>}, {transform_indices = @transform_3, window_bounds = array<i64: 8, 128>}]} {
    %c0 = arith.constant 0 : index
    %c0_0 = arith.constant 0 : index
    %0 = vector.load %arg1[%c0, %c0_0] : memref<16x128xf32, #tpu.memory_space<vmem>>, vector<16x128xf32>
    %c0_1 = arith.constant 0 : index
    %c0_2 = arith.constant 0 : index
    %1 = vector.load %arg2[%c0_1, %c0_2] : memref<16x128xi32, #tpu.memory_space<vmem>>, vector<16x128xi32>
    %c255_i32 = arith.constant 255 : i32
    %2 = vector.broadcast %c255_i32 : i32 to vector<16x128xi32>
    %3 = arith.cmpi ne, %1, %2 : vector<16x128xi32>
    %4 = arith.sitofp %1 : vector<16x128xi32> to vector<16x128xf32>
    %5 = arith.mulf %0, %4 : vector<16x128xf32>
    %cst = arith.constant 0.000000e+00 : f32
    %6 = vector.broadcast %cst : f32 to vector<16x128xf32>
    %7 = arith.select %3, %5, %6 : vector<16x128xi1>, vector<16x128xf32>
    %8 = arith.addf %0, %4 : vector<16x128xf32>
    %9 = arith.subf %8, %5 : vector<16x128xf32>
    %cst_3 = arith.constant 0.000000e+00 : f32
    %10 = vector.broadcast %cst_3 : f32 to vector<16x128xf32>
    %11 = arith.select %3, %9, %10 : vector<16x128xi1>, vector<16x128xf32>
    %12 = vector.shape_cast %7 : vector<16x128xf32> to vector<2x8x128xf32>
    %cst_4 = arith.constant dense<0.000000e+00> : vector<8x128xf32>
    %13 = vector.multi_reduction <add>, %12, %cst_4 [0] : vector<2x8x128xf32> to vector<8x128xf32>
    %14 = vector.shape_cast %11 : vector<16x128xf32> to vector<2x8x128xf32>
    %cst_5 = arith.constant dense<0.000000e+00> : vector<8x128xf32>
    %15 = vector.multi_reduction <add>, %14, %cst_5 [0] : vector<2x8x128xf32> to vector<8x128xf32>
    %c0_6 = arith.constant 0 : index
    %c0_7 = arith.constant 0 : index
    %16 = vector.load %arg3[%c0_6, %c0_7] : memref<8x128xf32, #tpu.memory_space<vmem>>, vector<8x128xf32>
    tpu.vector_store %arg3[%c0_6, %c0_7], %13 {strides = array<i32>} : memref<8x128xf32, #tpu.memory_space<vmem>>, vector<8x128xf32>,
    %c0_8 = arith.constant 0 : index
    %c0_9 = arith.constant 0 : index
    %17 = vector.load %arg4[%c0_8, %c0_9] : memref<8x128xf32, #tpu.memory_space<vmem>>, vector<8x128xf32>
    tpu.vector_store %arg4[%c0_8, %c0_9], %15 {strides = array<i32>} : memref<8x128xf32, #tpu.memory_space<vmem>>, vector<8x128xf32>,
    return
  }
  func.func @transform_0(%arg0: i32) -> (i32, i32) {
    %c0_i32 = arith.constant 0 : i32
    %c0_i32_0 = arith.constant 0 : i32
    return %arg0, %c0_i32 : i32, i32
  }
  func.func @transform_1(%arg0: i32) -> (i32, i32) {
    %c0_i32 = arith.constant 0 : i32
    %c0_i32_0 = arith.constant 0 : i32
    return %arg0, %c0_i32 : i32, i32
  }
  func.func @transform_2(%arg0: i32) -> (i32, i32) {
    %c0_i32 = arith.constant 0 : i32
    %c0_i32_0 = arith.constant 0 : i32
    return %arg0, %c0_i32 : i32, i32
  }
  func.func @transform_3(%arg0: i32) -> (i32, i32) {
    %c0_i32 = arith.constant 0 : i32
    %c0_i32_0 = arith.constant 0 : i32
    return %arg0, %c0_i32 : i32, i32
  }
}

</mosaic_0001>

<llo_original>
// kernel: tpu_custom_call.1
$region0: #{tpu_custom_call.1}
  #allocation0 [shape = 'u32[]', space=smem, size = 0x4, offset = 0x4, fixed_abs, tag = 'smem constant byte address 0x4 - core index']
  #allocation1 [shape = 'u32[72,128]{1,0:T(1,128)}', space=vmem, size = 0x9000, scoped, tag = 'internal scratch']
  %s0 = inlined_call_operand.hbm [shape: f32[16,128], index: 0, kind: input, shape index: {}]
  %s1 = inlined_call_operand.hbm [shape: s32[16,128], index: 1, kind: input, shape index: {}]
  %s2 = inlined_call_operand.hbm [shape: f32[8,128], index: 2, kind: output, shape index: {0}]
  %s3 = inlined_call_operand.hbm [shape: f32[8,128], index: 3, kind: output, shape index: {1}]
  %4 = xla_tuple %s2, %s3
  %s5 = sld [smem:[#allocation0]]
  $region34: #{tpu_custom_call.1} parent=0
    _
  %s7 = ssub.s32 1, %s5
  %s8 = scalar_select 0, %s7, %s5
  $region1: #{tpu_custom_call.1} parent=0
    #allocation2 [shape = 'u8[8192]{0}', space=vmem, size = 0x2000, scoped, tag = 'input window, operand 0, single buffered']
    #allocation3 [shape = 's32[1]{0}', space=sflag, size = 0x4, scoped, tag = 'scoped memory for tpu_custom_call.1']
    #allocation4 [shape = 's32[1]{0}', space=sflag, size = 0x4, scoped, tag = 'scoped memory for tpu_custom_call.1']
    #allocation5 [shape = 'u8[8192]{0}', space=vmem, size = 0x2000, scoped, tag = 'input window, operand 1, single buffered']
    #allocation6 [shape = 's32[1]{0}', space=sflag, size = 0x4, scoped, tag = 'scoped memory for tpu_custom_call.1']
    #allocation7 [shape = 'u8[4096]{0}', space=vmem, size = 0x1000, scoped, tag = 'output window, operand 0, single buffered']
    #allocation8 [shape = 'u8[4096]{0}', space=vmem, size = 0x1000, scoped, tag = 'output window, operand 1, single buffered']
    #allocation9 [shape = 's32[1]{0}', space=sflag, size = 0x4, scoped, tag = 'scoped memory for tpu_custom_call.1']
    %9 = vsyncpa [#allocation3], 0
    %10 = vsyncpa [#allocation6], 0
    %11 = vsyncpa [#allocation4], 0
    %12 = vsyncpa [#allocation9], 0
    // Predicated region
    $region2: #{tpu_custom_call.1} parent=1 // pred_check
      _
    $region3: #{tpu_custom_call.1} parent=1 // pred_check_branch
      %14 = sbr.rel (0) target = $region5
    $region4: #{tpu_custom_call.1} parent=1 // pred_region
      %16 = vsyncadd [#allocation3], 0
      %s17 = sshll.u32 %s0, 4
      %s18 = int_to_ptr.hbm [resolvable:$true] %s17
      %s19 = sshll.u32 [#allocation2], 4
      %s20 = int_to_ptr.vmem [resolvable:$true] %s19
      %25 = dma.hbm_to_vmem [thread:$0]  %s18, 256, %s20, [#allocation3], 128, 128, 8
    $region5: #{tpu_custom_call.1} parent=1 // pred_fallthru
      _
    // Predicated region
    $region6: #{tpu_custom_call.1} parent=1 // pred_check
      _
    $region7: #{tpu_custom_call.1} parent=1 // pred_check_branch
      %27 = sbr.rel (0) target = $region9
    $region8: #{tpu_custom_call.1} parent=1 // pred_region
      %29 = vsyncadd [#allocation6], 0
      %s30 = sshll.u32 %s1, 4
      %s31 = int_to_ptr.hbm [resolvable:$true] %s30
      %s32 = sshll.u32 [#allocation5], 4
      %s33 = int_to_ptr.vmem [resolvable:$true] %s32
      %38 = dma.hbm_to_vmem [thread:$0]  %s31, 256, %s33, [#allocation6], 128, 128, 8
    $region9: #{tpu_custom_call.1} parent=1 // pred_fallthru
      _
    // Predicated region
    $region10: #{tpu_custom_call.1} parent=1 // pred_check
      _
    $region11: #{tpu_custom_call.1} parent=1 // pred_check_branch
      %40 = sbr.rel (0) target = $region13
    $region12: #{tpu_custom_call.1} parent=1 // pred_region
      %42 = dma.done [#allocation3], 256
    $region13: #{tpu_custom_call.1} parent=1 // pred_fallthru
      _
    // Predicated region
    $region14: #{tpu_custom_call.1} parent=1 // pred_check
      _
    $region15: #{tpu_custom_call.1} parent=1 // pred_check_branch
      %44 = sbr.rel (0) target = $region17
    $region16: #{tpu_custom_call.1} parent=1 // pred_region
      %46 = dma.done [#allocation6], 256
    $region17: #{tpu_custom_call.1} parent=1 // pred_fallthru
      _
    %v47 = vld [vmem:[#allocation2] sm:$0xff]
    %v48 = vld [vmem:[#allocation2 + $0x8] sm:$0xff]
    %v49 = vld [vmem:[#allocation5] sm:$0xff]
    %v50 = vld [vmem:[#allocation5 + $0x8] sm:$0xff]
    %vm51 = vcmp.ne.s32.totalorder %v49, 255
    %vm52 = vcmp.ne.s32.totalorder %v50, 255
    %v53 = vcvt.s32.f32 %v49
    %v54 = vcvt.s32.f32 %v50
    %v55 = vmul.f32 %v47, %v53
    %v56 = vmul.f32 %v48, %v54
    %v57 = vsel %vm51, %v55, 0.0
    %v58 = vsel %vm52, %v56, 0.0
    %v59 = vadd.f32 %v47, %v53
    %v60 = vadd.f32 %v48, %v54
    %v61 = vsub.f32 %v59, %v55
    %v62 = vsub.f32 %v60, %v56
    %v63 = vsel %vm51, %v61, 0.0
    %v64 = vsel %vm52, %v62, 0.0
    %v65 = vadd.f32 %v57, %v58
    %v66 = vadd.f32 %v63, %v64
    %67 = vst [vmem:[#allocation7] sm:$0xff] %v65
    %68 = vst [vmem:[#allocation8] sm:$0xff] %v66
    // Predicated region
    $region18: #{tpu_custom_call.1} parent=1 // pred_check
      _
    $region19: #{tpu_custom_call.1} parent=1 // pred_check_branch
      %70 = sbr.rel (0) target = $region21
    $region20: #{tpu_custom_call.1} parent=1 // pred_region
      %72 = vsyncadd [#allocation4], 0
      %s74 = sshll.u32 [#allocation7], 4
      %s75 = int_to_ptr.vmem [resolvable:$true] %s74
      %s76 = sshll.u32 %s2, 4
      %s77 = int_to_ptr.hbm [resolvable:$true] %s76
      %79 = dma.vmem_to_hbm [thread:$0]  %s75, 128, %s77, [#allocation4]
    $region21: #{tpu_custom_call.1} parent=1 // pred_fallthru
      _
    // Predicated region
    $region22: #{tpu_custom_call.1} parent=1 // pred_check
      _
    $region23: #{tpu_custom_call.1} parent=1 // pred_check_branch
      %81 = sbr.rel (0) target = $region25
    $region24: #{tpu_custom_call.1} parent=1 // pred_region
      %83 = vsyncadd [#allocation9], 0
      %s85 = sshll.u32 [#allocation8], 4
      %s86 = int_to_ptr.vmem [resolvable:$true] %s85
      %s87 = sshll.u32 %s3, 4
      %s88 = int_to_ptr.hbm [resolvable:$true] %s87
      %90 = dma.vmem_to_hbm [thread:$0]  %s86, 128, %s88, [#allocation9]
    $region25: #{tpu_custom_call.1} parent=1 // pred_fallthru
      _
    // Predicated region
    $region26: #{tpu_custom_call.1} parent=1 // pred_check
      _
    $region27: #{tpu_custom_call.1} parent=1 // pred_check_branch
      %92 = sbr.rel (0) target = $region29
    $region28: #{tpu_custom_call.1} parent=1 // pred_region
      %94 = dma.done [#allocation4], 128
    $region29: #{tpu_custom_call.1} parent=1 // pred_fallthru
      _
    // Predicated region
    $region30: #{tpu_custom_call.1} parent=1 // pred_check
      _
    $region31: #{tpu_custom_call.1} parent=1 // pred_check_branch
      %96 = sbr.rel (0) target = $region33
    $region32: #{tpu_custom_call.1} parent=1 // pred_region
      %98 = dma.done [#allocation9], 128
    $region33: #{tpu_custom_call.1} parent=1 // pred_fallthru
      _
    %99 = vsyncpa [#allocation3], 1
    %100 = vsyncpa [#allocation6], 1
    %101 = vsyncpa [#allocation4], 1
    %102 = vsyncpa [#allocation9], 1

</llo_original>
